<compile_context>
chip_gen: v5e
topology: v5e:2x2
jax: 0.10.0
libtpu: 0.0.40
codegen_flags: <defaults>
</compile_context>

<pallas_src>
import jax
import jax.numpy as jnp
from jax.experimental import pallas as pl
from jax.experimental.pallas import tpu as pltpu


def _round_up(n, m):
    return ((n + m - 1) // m) * m


def _make_kernel(offsets):
    o = offsets  # cumulative offsets into the concatenated bias column

    def kernel(x_ref, w1_ref, w2_ref, w3_ref, w4_ref, w5_ref, w6_ref, b_ref,
               dec_ref, enc_ref):
        # Activations are transposed: (features, TILE_B) -> batch on lanes.
        x = x_ref[...]
        b = b_ref[...].astype(jnp.float32)          # (total_out, 1)

        def layer(w_ref, a, lo, hi):
            w = w_ref[...]
            return jnp.dot(w, a.astype(w.dtype),
                           preferred_element_type=jnp.float32) + b[lo:hi, :]

        # ---- encoder ----
        h = jnp.tanh(layer(w1_ref, x, o[0], o[1]))
        h = jnp.tanh(layer(w2_ref, h, o[1], o[2]))
        t = layer(w3_ref, h, o[2], o[3])            # keep TernaryTanh input in f32
        # TernaryTanh: 1.5*tanh(t) + 0.5*tanh(-3t); tanh(3t) = (3u+u^3)/(1+3u^2)
        u = jnp.tanh(t)
        tern = 1.5 * u - 0.5 * (3.0 * u + u * u * u) / (1.0 + 3.0 * u * u)
        enc = jnp.round(tern)                       # round-half-to-even == torch.round_
        enc_ref[...] = enc.astype(enc_ref.dtype)

        # ---- decoder ----
        d = jnp.tanh(layer(w4_ref, enc, o[3], o[4]))
        d = jnp.tanh(layer(w5_ref, d, o[4], o[5]))
        dec_ref[...] = jnp.tanh(layer(w6_ref, d, o[5], o[6])).astype(dec_ref.dtype)

    return kernel


def hxqbn_forward(x, params, *, tile_b=None, use_bf16=False):
    """Pallas forward of HxQBNet. Returns (decoded, encoded) like the module."""
    B, input_size = x.shape
    f1 = params["w1"].shape[0]
    f2 = params["w2"].shape[0]
    x_features = params["w3"].shape[0]

    sizes = (f1, f2, x_features, f2, f1, input_size)
    offsets = [0]
    for s in sizes:
        offsets.append(offsets[-1] + s)
    total_out = offsets[-1]

    if tile_b is None:
        tile_b = min(512, _round_up(max(B, 1), 128))   # lane-dense batch tile
    b_pad = _round_up(B, tile_b)
    grid = (b_pad // tile_b,)

    compute_dtype = jnp.bfloat16 if use_bf16 else jnp.float32

    # Batch onto the lane axis: (features, batch), zero-padded to tile multiple.
    xt = jnp.transpose(x).astype(compute_dtype)
    if b_pad != B:
        xt = jnp.pad(xt, ((0, 0), (0, b_pad - B)))

    weights = [params[f"w{i}"].astype(compute_dtype) for i in range(1, 7)]
    b_cat = jnp.concatenate(
        [params[f"b{i}"].reshape(-1, 1) for i in range(1, 7)], axis=0
    ).astype(jnp.float32)                               # (total_out, 1)

    const = lambda i: (0, 0)        # weights / biases resident in VMEM
    batch_map = lambda i: (0, i)    # only the batch (lane) axis is tiled

    in_specs = [pl.BlockSpec((input_size, tile_b), batch_map)]
    in_specs += [pl.BlockSpec(w.shape, const) for w in weights]
    in_specs += [pl.BlockSpec((total_out, 1), const)]

    out_specs = (pl.BlockSpec((input_size, tile_b), batch_map),
                 pl.BlockSpec((x_features, tile_b), batch_map))
    out_shape = (jax.ShapeDtypeStruct((input_size, b_pad), jnp.float32),
                 jax.ShapeDtypeStruct((x_features, b_pad), jnp.float32))

    dec_t, enc_t = pl.pallas_call(
        _make_kernel(tuple(offsets)),
        out_shape=out_shape,
        grid_spec=pltpu.PrefetchScalarGridSpec(
            num_scalar_prefetch=0,
            grid=grid,
            in_specs=in_specs,
            out_specs=out_specs,
        ),
        compiler_params=pltpu.CompilerParams(
            dimension_semantics=("parallel",),          # megacore on v7x
            vmem_limit_bytes=32 * 1024 * 1024,          # safe on v5e/v6e/v7x
        ),
    )(xt, *weights, b_cat)

    dec = jnp.transpose(dec_t[:, :B])
    enc = jnp.transpose(enc_t[:, :B])
    return dec, enc


def init_params(key, input_size, x_features):
    """PyTorch nn.Linear-style uniform init; weights stored (out, in)."""
    f1, f2 = 8 * x_features, 4 * x_features
    dims = [(f1, input_size), (f2, f1), (x_features, f2),     # encoder
            (f2, x_features), (f1, f2), (input_size, f1)]     # decoder
    keys = jax.random.split(key, 2 * len(dims))
    params = {}
    for i, (dout, din) in enumerate(dims):
        bound = 1.0 / float(din) ** 0.5
        params[f"w{i + 1}"] = jax.random.uniform(
            keys[2 * i], (dout, din), jnp.float32, -bound, bound)
        params[f"b{i + 1}"] = jax.random.uniform(
            keys[2 * i + 1], (dout,), jnp.float32, -bound, bound)
    return params


def _reference(x, p):
    hi = jax.lax.Precision.HIGHEST
    mm = lambda a, w: jnp.dot(a, w.T, precision=hi)
    h = jnp.tanh(mm(x, p["w1"]) + p["b1"])
    h = jnp.tanh(mm(h, p["w2"]) + p["b2"])
    t = mm(h, p["w3"]) + p["b3"]
    enc = jnp.round(1.5 * jnp.tanh(t) + 0.5 * jnp.tanh(-3.0 * t))
    d = jnp.tanh(mm(enc, p["w4"]) + p["b4"])
    d = jnp.tanh(mm(d, p["w5"]) + p["b5"])
    dec = jnp.tanh(mm(d, p["w6"]) + p["b6"])
    return dec, enc


if __name__ == "__main__":
    batch = 8
    input_size = 32     # GRU hidden size fed into the QBN
    x_features = 8      # bottleneck size -> f1 = 64, f2 = 32

    key = jax.random.PRNGKey(0)
    kx, kp = jax.random.split(key)
    x = jax.random.normal(kx, (batch, input_size), dtype=jnp.float32)
    params = init_params(kp, input_size, x_features)

    dec, enc = hxqbn_forward(x, params)
    jax.block_until_ready((dec, enc))

    dec_ref, enc_ref = _reference(x, params)
    assert dec.shape == (batch, input_size) and enc.shape == (batch, x_features)
    assert jnp.allclose(dec, dec_ref, atol=1e-4, rtol=1e-4)
    assert jnp.allclose(enc, enc_ref, atol=1e-4, rtol=1e-4)

    print("KERNEL_OK")
</pallas_src>

<mosaic_0001>
module attributes {stable_mosaic.version = 11 : i64} {
  func.func @kernel(%arg0: i32, %arg1: memref<32x128xf32, #tpu.memory_space<vmem>>, %arg2: memref<64x32xf32, #tpu.memory_space<vmem>>, %arg3: memref<32x64xf32, #tpu.memory_space<vmem>>, %arg4: memref<8x32xf32, #tpu.memory_space<vmem>>, %arg5: memref<32x8xf32, #tpu.memory_space<vmem>>, %arg6: memref<64x32xf32, #tpu.memory_space<vmem>>, %arg7: memref<32x64xf32, #tpu.memory_space<vmem>>, %arg8: memref<232x1xf32, #tpu.memory_space<vmem>>, %arg9: memref<32x128xf32, #tpu.memory_space<vmem>>, %arg10: memref<8x128xf32, #tpu.memory_space<vmem>>) attributes {dimension_semantics = [#tpu.dimension_semantics<parallel>], iteration_bounds = array<i64: 1>, scalar_prefetch = 0 : i64, scratch_operands = 0 : i64, tpu.core_type = #tpu.core_type<tc>, window_params = [{transform_indices = @transform_0, window_bounds = array<i64: 32, 128>}, {pipeline_mode = #tpu.pipeline_mode<synchronous>, transform_indices = @transform_1, window_bounds = array<i64: 64, 32>}, {pipeline_mode = #tpu.pipeline_mode<synchronous>, transform_indices = @transform_2, window_bounds = array<i64: 32, 64>}, {pipeline_mode = #tpu.pipeline_mode<synchronous>, transform_indices = @transform_3, window_bounds = array<i64: 8, 32>}, {pipeline_mode = #tpu.pipeline_mode<synchronous>, transform_indices = @transform_4, window_bounds = array<i64: 32, 8>}, {pipeline_mode = #tpu.pipeline_mode<synchronous>, transform_indices = @transform_5, window_bounds = array<i64: 64, 32>}, {pipeline_mode = #tpu.pipeline_mode<synchronous>, transform_indices = @transform_6, window_bounds = array<i64: 32, 64>}, {pipeline_mode = #tpu.pipeline_mode<synchronous>, transform_indices = @transform_7, window_bounds = array<i64: 232, 1>}, {transform_indices = @transform_8, window_bounds = array<i64: 32, 128>}, {transform_indices = @transform_9, window_bounds = array<i64: 8, 128>}]} {
    %c0 = arith.constant 0 : index
    %c0_0 = arith.constant 0 : index
    %0 = vector.load %arg1[%c0, %c0_0] : memref<32x128xf32, #tpu.memory_space<vmem>>, vector<32x128xf32>
    %c0_1 = arith.constant 0 : index
    %c0_2 = arith.constant 0 : index
    %1 = vector.load %arg8[%c0_1, %c0_2] : memref<232x1xf32, #tpu.memory_space<vmem>>, vector<232x1xf32>
    %c0_3 = arith.constant 0 : index
    %c0_4 = arith.constant 0 : index
    %2 = vector.load %arg2[%c0_3, %c0_4] : memref<64x32xf32, #tpu.memory_space<vmem>>, vector<64x32xf32>
    %cst = arith.constant dense<0.000000e+00> : vector<64x128xf32>
    %3 = tpu.matmul %2, %0, %cst {dimension_numbers = #tpu.dot_dimension_numbers<[1], [0], [0], [1], [0, 0, 1, 1], [], []>} : vector<64x32xf32>, vector<32x128xf32>, vector<64x128xf32> -> vector<64x128xf32>
    %4 = vector.extract_strided_slice %1 {offsets = [0, 0], sizes = [64, 1], strides = [1, 1]} : vector<232x1xf32> to vector<64x1xf32>
    %5 = vector.broadcast %4 : vector<64x1xf32> to vector<64x128xf32>
    %6 = arith.addf %3, %5 : vector<64x128xf32>
    %7 = math.tanh %6 : vector<64x128xf32>
    %c0_5 = arith.constant 0 : index
    %c0_6 = arith.constant 0 : index
    %8 = vector.load %arg3[%c0_5, %c0_6] : memref<32x64xf32, #tpu.memory_space<vmem>>, vector<32x64xf32>
    %cst_7 = arith.constant dense<0.000000e+00> : vector<32x128xf32>
    %9 = tpu.matmul %8, %7, %cst_7 {dimension_numbers = #tpu.dot_dimension_numbers<[1], [0], [0], [1], [0, 0, 1, 1], [], []>} : vector<32x64xf32>, vector<64x128xf32>, vector<32x128xf32> -> vector<32x128xf32>
    %10 = vector.extract_strided_slice %1 {offsets = [64, 0], sizes = [32, 1], strides = [1, 1]} : vector<232x1xf32> to vector<32x1xf32>
    %11 = vector.broadcast %10 : vector<32x1xf32> to vector<32x128xf32>
    %12 = arith.addf %9, %11 : vector<32x128xf32>
    %13 = math.tanh %12 : vector<32x128xf32>
    %c0_8 = arith.constant 0 : index
    %c0_9 = arith.constant 0 : index
    %14 = vector.load %arg4[%c0_8, %c0_9] : memref<8x32xf32, #tpu.memory_space<vmem>>, vector<8x32xf32>
    %cst_10 = arith.constant dense<0.000000e+00> : vector<8x128xf32>
    %15 = tpu.matmul %14, %13, %cst_10 {dimension_numbers = #tpu.dot_dimension_numbers<[1], [0], [0], [1], [0, 0, 1, 1], [], []>} : vector<8x32xf32>, vector<32x128xf32>, vector<8x128xf32> -> vector<8x128xf32>
    %16 = vector.extract_strided_slice %1 {offsets = [96, 0], sizes = [8, 1], strides = [1, 1]} : vector<232x1xf32> to vector<8x1xf32>
    %17 = vector.broadcast %16 : vector<8x1xf32> to vector<8x128xf32>
    %18 = arith.addf %15, %17 : vector<8x128xf32>
    %19 = math.tanh %18 : vector<8x128xf32>
    %cst_11 = arith.constant 1.500000e+00 : f32
    %20 = vector.broadcast %cst_11 : f32 to vector<8x128xf32>
    %21 = arith.mulf %20, %19 : vector<8x128xf32>
    %cst_12 = arith.constant 3.000000e+00 : f32
    %22 = vector.broadcast %cst_12 : f32 to vector<8x128xf32>
    %23 = arith.mulf %22, %19 : vector<8x128xf32>
    %24 = arith.mulf %19, %19 : vector<8x128xf32>
    %25 = arith.mulf %24, %19 : vector<8x128xf32>
    %26 = arith.addf %23, %25 : vector<8x128xf32>
    %cst_13 = arith.constant 5.000000e-01 : f32
    %27 = vector.broadcast %cst_13 : f32 to vector<8x128xf32>
    %28 = arith.mulf %27, %26 : vector<8x128xf32>
    %cst_14 = arith.constant 3.000000e+00 : f32
    %29 = vector.broadcast %cst_14 : f32 to vector<8x128xf32>
    %30 = arith.mulf %29, %19 : vector<8x128xf32>
    %31 = arith.mulf %30, %19 : vector<8x128xf32>
    %cst_15 = arith.constant 1.000000e+00 : f32
    %32 = vector.broadcast %cst_15 : f32 to vector<8x128xf32>
    %33 = arith.addf %32, %31 : vector<8x128xf32>
    %34 = arith.divf %28, %33 : vector<8x128xf32>
    %35 = arith.subf %21, %34 : vector<8x128xf32>
    %36 = math.roundeven %35 : vector<8x128xf32>
    %c0_16 = arith.constant 0 : index
    %c0_17 = arith.constant 0 : index
    %37 = vector.load %arg10[%c0_16, %c0_17] : memref<8x128xf32, #tpu.memory_space<vmem>>, vector<8x128xf32>
    tpu.vector_store %arg10[%c0_16, %c0_17], %36 {strides = array<i32>} : memref<8x128xf32, #tpu.memory_space<vmem>>, vector<8x128xf32>,
    %c0_18 = arith.constant 0 : index
    %c0_19 = arith.constant 0 : index
    %38 = vector.load %arg5[%c0_18, %c0_19] : memref<32x8xf32, #tpu.memory_space<vmem>>, vector<32x8xf32>
    %cst_20 = arith.constant dense<0.000000e+00> : vector<32x128xf32>
    %39 = tpu.matmul %38, %36, %cst_20 {dimension_numbers = #tpu.dot_dimension_numbers<[1], [0], [0], [1], [0, 0, 1, 1], [], []>} : vector<32x8xf32>, vector<8x128xf32>, vector<32x128xf32> -> vector<32x128xf32>
    %40 = vector.extract_strided_slice %1 {offsets = [104, 0], sizes = [32, 1], strides = [1, 1]} : vector<232x1xf32> to vector<32x1xf32>
    %41 = vector.broadcast %40 : vector<32x1xf32> to vector<32x128xf32>
    %42 = arith.addf %39, %41 : vector<32x128xf32>
    %43 = math.tanh %42 : vector<32x128xf32>
    %c0_21 = arith.constant 0 : index
    %c0_22 = arith.constant 0 : index
    %44 = vector.load %arg6[%c0_21, %c0_22] : memref<64x32xf32, #tpu.memory_space<vmem>>, vector<64x32xf32>
    %cst_23 = arith.constant dense<0.000000e+00> : vector<64x128xf32>
    %45 = tpu.matmul %44, %43, %cst_23 {dimension_numbers = #tpu.dot_dimension_numbers<[1], [0], [0], [1], [0, 0, 1, 1], [], []>} : vector<64x32xf32>, vector<32x128xf32>, vector<64x128xf32> -> vector<64x128xf32>
    %46 = vector.extract_strided_slice %1 {offsets = [136, 0], sizes = [64, 1], strides = [1, 1]} : vector<232x1xf32> to vector<64x1xf32>
    %47 = vector.broadcast %46 : vector<64x1xf32> to vector<64x128xf32>
    %48 = arith.addf %45, %47 : vector<64x128xf32>
    %49 = math.tanh %48 : vector<64x128xf32>
    %c0_24 = arith.constant 0 : index
    %c0_25 = arith.constant 0 : index
    %50 = vector.load %arg7[%c0_24, %c0_25] : memref<32x64xf32, #tpu.memory_space<vmem>>, vector<32x64xf32>
    %cst_26 = arith.constant dense<0.000000e+00> : vector<32x128xf32>
    %51 = tpu.matmul %50, %49, %cst_26 {dimension_numbers = #tpu.dot_dimension_numbers<[1], [0], [0], [1], [0, 0, 1, 1], [], []>} : vector<32x64xf32>, vector<64x128xf32>, vector<32x128xf32> -> vector<32x128xf32>
    %52 = vector.extract_strided_slice %1 {offsets = [200, 0], sizes = [32, 1], strides = [1, 1]} : vector<232x1xf32> to vector<32x1xf32>
    %53 = vector.broadcast %52 : vector<32x1xf32> to vector<32x128xf32>
    %54 = arith.addf %51, %53 : vector<32x128xf32>
    %55 = math.tanh %54 : vector<32x128xf32>
    %c0_27 = arith.constant 0 : index
    %c0_28 = arith.constant 0 : index
    %56 = vector.load %arg9[%c0_27, %c0_28] : memref<32x128xf32, #tpu.memory_space<vmem>>, vector<32x128xf32>
    tpu.vector_store %arg9[%c0_27, %c0_28], %55 {strides = array<i32>} : memref<32x128xf32, #tpu.memory_space<vmem>>, vector<32x128xf32>,
    return
  }
  func.func @transform_0(%arg0: i32) -> (i32, i32) {
    %c0_i32 = arith.constant 0 : i32
    %c0_i32_0 = arith.constant 0 : i32
    return %c0_i32, %arg0 : i32, i32
  }
  func.func @transform_1(%arg0: i32) -> (i32, i32) {
    %c0_i32 = arith.constant 0 : i32
    %c0_i32_0 = arith.constant 0 : i32
    %c0_i32_1 = arith.constant 0 : i32
    return %c0_i32, %c0_i32_0 : i32, i32
  }
  func.func @transform_2(%arg0: i32) -> (i32, i32) {
    %c0_i32 = arith.constant 0 : i32
    %c0_i32_0 = arith.constant 0 : i32
    %c0_i32_1 = arith.constant 0 : i32
    return %c0_i32, %c0_i32_0 : i32, i32
  }
  func.func @transform_3(%arg0: i32) -> (i32, i32) {
    %c0_i32 = arith.constant 0 : i32
    %c0_i32_0 = arith.constant 0 : i32
    %c0_i32_1 = arith.constant 0 : i32
    return %c0_i32, %c0_i32_0 : i32, i32
  }
  func.func @transform_4(%arg0: i32) -> (i32, i32) {
    %c0_i32 = arith.constant 0 : i32
    %c0_i32_0 = arith.constant 0 : i32
    %c0_i32_1 = arith.constant 0 : i32
    return %c0_i32, %c0_i32_0 : i32, i32
  }
  func.func @transform_5(%arg0: i32) -> (i32, i32) {
    %c0_i32 = arith.constant 0 : i32
    %c0_i32_0 = arith.constant 0 : i32
    %c0_i32_1 = arith.constant 0 : i32
    return %c0_i32, %c0_i32_0 : i32, i32
  }
  func.func @transform_6(%arg0: i32) -> (i32, i32) {
    %c0_i32 = arith.constant 0 : i32
    %c0_i32_0 = arith.constant 0 : i32
    %c0_i32_1 = arith.constant 0 : i32
    return %c0_i32, %c0_i32_0 : i32, i32
  }
  func.func @transform_7(%arg0: i32) -> (i32, i32) {
    %c0_i32 = arith.constant 0 : i32
    %c0_i32_0 = arith.constant 0 : i32
    %c0_i32_1 = arith.constant 0 : i32
    return %c0_i32, %c0_i32_0 : i32, i32
  }
  func.func @transform_8(%arg0: i32) -> (i32, i32) {
    %c0_i32 = arith.constant 0 : i32
    %c0_i32_0 = arith.constant 0 : i32
    return %c0_i32, %arg0 : i32, i32
  }
  func.func @transform_9(%arg0: i32) -> (i32, i32) {
    %c0_i32 = arith.constant 0 : i32
    %c0_i32_0 = arith.constant 0 : i32
    return %c0_i32, %arg0 : i32, i32
  }
}

</mosaic_0001>

<llo_original>
// kernel: tpu_custom_call.1
$region0: #{tpu_custom_call.1}
  #allocation0 [shape = 'u32[]', space=smem, size = 0x4, offset = 0x4, fixed_abs, tag = 'smem constant byte address 0x4 - core index']
  #allocation1 [shape = 'u32[72,128]{1,0:T(1,128)}', space=vmem, size = 0x9000, scoped, tag = 'internal scratch']
  %s0 = inlined_call_operand.vmem [shape: f32[32,128], index: 0, kind: input, shape index: {}]
  %s1 = inlined_call_operand.vmem [shape: f32[64,32], index: 1, kind: input, shape index: {}]
  %s2 = inlined_call_operand.vmem [shape: f32[32,64], index: 2, kind: input, shape index: {}]
  %s3 = inlined_call_operand.vmem [shape: f32[8,32], index: 3, kind: input, shape index: {}]
  %s4 = inlined_call_operand.vmem [shape: f32[32,8], index: 4, kind: input, shape index: {}]
  %s5 = inlined_call_operand.vmem [shape: f32[64,32], index: 5, kind: input, shape index: {}]
  %s6 = inlined_call_operand.vmem [shape: f32[32,64], index: 6, kind: input, shape index: {}]
  %s7 = inlined_call_operand.vmem [shape: f32[232,1], index: 7, kind: input, shape index: {}]
  %s8 = inlined_call_operand.hbm [shape: f32[32,128], index: 8, kind: output, shape index: {0}]
  %s9 = inlined_call_operand.hbm [shape: f32[8,128], index: 9, kind: output, shape index: {1}]
  %10 = xla_tuple %s8, %s9
  %s11 = sld [smem:[#allocation0]]
  $region50: #{tpu_custom_call.1} parent=0
    _
  %s13 = ssub.s32 1, %s11
  %s14 = scalar_select 0, %s13, %s11
  $region1: #{tpu_custom_call.1} parent=0
    #allocation2 [shape = 'u8[16384]{0}', space=vmem, size = 0x4000, scoped, tag = 'output window, operand 0, single buffered']
    #allocation3 [shape = 's32[1]{0}', space=sflag, size = 0x4, scoped, tag = 'scoped memory for tpu_custom_call.1']
    #allocation4 [shape = 'u8[4096]{0}', space=vmem, size = 0x1000, scoped, tag = 'output window, operand 1, single buffered']
    #allocation5 [shape = 's32[1]{0}', space=sflag, size = 0x4, scoped, tag = 'scoped memory for tpu_custom_call.1']
    %15 = vsyncpa [#allocation3], 0
    %16 = vsyncpa [#allocation5], 0
    // Predicated region
    $region2: #{tpu_custom_call.1} parent=1 // pred_check
      _
    $region3: #{tpu_custom_call.1} parent=1 // pred_check_branch
      %18 = sbr.rel (0) target = $region5
    $region4: #{tpu_custom_call.1} parent=1 // pred_region
      _
    $region5: #{tpu_custom_call.1} parent=1 // pred_fallthru
      _
    // Predicated region
    $region6: #{tpu_custom_call.1} parent=1 // pred_check
      _
    $region7: #{tpu_custom_call.1} parent=1 // pred_check_branch
      %20 = sbr.rel (0) target = $region9
    $region8: #{tpu_custom_call.1} parent=1 // pred_region
      _
    $region9: #{tpu_custom_call.1} parent=1 // pred_fallthru
      _
    // Predicated region
    $region10: #{tpu_custom_call.1} parent=1 // pred_check
      _
    $region11: #{tpu_custom_call.1} parent=1 // pred_check_branch
      %22 = sbr.rel (0) target = $region13
    $region12: #{tpu_custom_call.1} parent=1 // pred_region
      _
    $region13: #{tpu_custom_call.1} parent=1 // pred_fallthru
      _
    // Predicated region
    $region14: #{tpu_custom_call.1} parent=1 // pred_check
      _
    $region15: #{tpu_custom_call.1} parent=1 // pred_check_branch
      %24 = sbr.rel (0) target = $region17
    $region16: #{tpu_custom_call.1} parent=1 // pred_region
      _
    $region17: #{tpu_custom_call.1} parent=1 // pred_fallthru
      _
    // Predicated region
    $region18: #{tpu_custom_call.1} parent=1 // pred_check
      _
    $region19: #{tpu_custom_call.1} parent=1 // pred_check_branch
      %26 = sbr.rel (0) target = $region21
    $region20: #{tpu_custom_call.1} parent=1 // pred_region
      _
    $region21: #{tpu_custom_call.1} parent=1 // pred_fallthru
      _
    // Predicated region
    $region22: #{tpu_custom_call.1} parent=1 // pred_check
      _
    $region23: #{tpu_custom_call.1} parent=1 // pred_check_branch
      %28 = sbr.rel (0) target = $region25
    $region24: #{tpu_custom_call.1} parent=1 // pred_region
      _
    $region25: #{tpu_custom_call.1} parent=1 // pred_fallthru
      _
    // Predicated region
    $region26: #{tpu_custom_call.1} parent=1 // pred_check
      _
    $region27: #{tpu_custom_call.1} parent=1 // pred_check_branch
      %30 = sbr.rel (0) target = $region29
    $region28: #{tpu_custom_call.1} parent=1 // pred_region
      _
    $region29: #{tpu_custom_call.1} parent=1 // pred_fallthru
      _
    // Predicated region
    $region30: #{tpu_custom_call.1} parent=1 // pred_check
      _
    $region31: #{tpu_custom_call.1} parent=1 // pred_check_branch
      %32 = sbr.rel (0) target = $region33
    $region32: #{tpu_custom_call.1} parent=1 // pred_region
      _
    $region33: #{tpu_custom_call.1} parent=1 // pred_fallthru
      _
    %v33 = vld [vmem:[%s0] sm:$0xff]
    %v34 = vld [vmem:[%s0 + $0x8] sm:$0xff]
    %v35 = vld [vmem:[%s0 + $0x10] sm:$0xff]
    %v36 = vld [vmem:[%s0 + $0x18] sm:$0xff]
    %v37 = vld [vmem:[%s7] sm:$0xff]
    %v38 = vld [vmem:[%s7 + $0x8] sm:$0xff]
    %v39 = vld [vmem:[%s7 + $0x10] sm:$0xff]
    %v40 = vld [vmem:[%s7 + $0x18] sm:$0xff]
    %v41 = vld [vmem:[%s7 + $0x20] sm:$0xff]
    %v42 = vld [vmem:[%s7 + $0x28] sm:$0xff]
    %v43 = vld [vmem:[%s7 + $0x30] sm:$0xff]
    %v44 = vld [vmem:[%s7 + $0x38] sm:$0xff]
    %v45 = vld [vmem:[%s7 + $0x40] sm:$0xff]
    %v46 = vld [vmem:[%s7 + $0x48] sm:$0xff]
    %v47 = vld [vmem:[%s7 + $0x50] sm:$0xff]
    %v48 = vld [vmem:[%s7 + $0x58] sm:$0xff]
    %v49 = vld [vmem:[%s7 + $0x60] sm:$0xff]
    %v50 = vld [vmem:[%s7 + $0x68] sm:$0xff]
    %v51 = vld [vmem:[%s7 + $0x70] sm:$0xff]
    %v52 = vld [vmem:[%s7 + $0x78] sm:$0xff]
    %v53 = vld [vmem:[%s7 + $0x80] sm:$0xff]
    %v54 = vld [vmem:[%s7 + $0x88] sm:$0xff]
    %v55 = vld [vmem:[%s7 + $0x90] sm:$0xff]
    %v56 = vld [vmem:[%s7 + $0x98] sm:$0xff]
    %v57 = vld [vmem:[%s7 + $0xa0] sm:$0xff]
    %v58 = vld [vmem:[%s7 + $0xa8] sm:$0xff]
    %v59 = vld [vmem:[%s7 + $0xb0] sm:$0xff]
    %v60 = vld [vmem:[%s7 + $0xb8] sm:$0xff]
    %v61 = vld [vmem:[%s7 + $0xc0] sm:$0xff]
    %v62 = vld [vmem:[%s7 + $0xc8] sm:$0xff]
    %v63 = vld [vmem:[%s7 + $0xd0] sm:$0xff]
    %v64 = vld [vmem:[%s7 + $0xd8] sm:$0xff]
    %v65 = vld [vmem:[%s7 + $0xe0] sm:$0xff]
    %v66 = vld [vmem:[%s1] sm:$0xff]
    %v67 = vld [vmem:[%s1 + $0x8] sm:$0xff]
    %v68 = vld [vmem:[%s1 + $0x10] sm:$0xff]
    %v69 = vld [vmem:[%s1 + $0x18] sm:$0xff]
    %v70 = vld [vmem:[%s1 + $0x20] sm:$0xff]
    %v71 = vld [vmem:[%s1 + $0x28] sm:$0xff]
    %v72 = vld [vmem:[%s1 + $0x30] sm:$0xff]
    %v73 = vld [vmem:[%s1 + $0x38] sm:$0xff]
    %75 = vset.pattern.permute.xlu0 0
    %76 = vperm.xlu0 %75, %v37
    %v77 = vpop.permute.xlu0 %76
    %80 = vset.pattern.permute.xlu0 0
    %81 = vperm.xlu0 %80, %v38
    %v82 = vpop.permute.xlu0 %81
    %85 = vset.pattern.permute.xlu0 0
    %86 = vperm.xlu0 %85, %v39
    %v87 = vpop.permute.xlu0 %86
    %90 = vset.pattern.permute.xlu0 0
    %91 = vperm.xlu0 %90, %v40
    %v92 = vpop.permute.xlu0 %91
    %95 = vset.pattern.permute.xlu0 0
    %96 = vperm.xlu0 %95, %v41
    %v97 = vpop.permute.xlu0 %96
    %100 = vset.pattern.permute.xlu0 0
    %101 = vperm.xlu0 %100, %v42
    %v102 = vpop.permute.xlu0 %101
    %105 = vset.pattern.permute.xlu0 0
    %106 = vperm.xlu0 %105, %v43
    %v107 = vpop.permute.xlu0 %106
    %110 = vset.pattern.permute.xlu0 0
    %111 = vperm.xlu0 %110, %v44
    %v112 = vpop.permute.xlu0 %111
    %vm114 = vcmask 261120
    %v116 = vsel %vm114, %v66, 0
    %v119 = vsel %vm114, %v67, 0
    %v122 = vsel %vm114, %v68, 0
    %v125 = vsel %vm114, %v69, 0
    %v128 = vsel %vm114, %v70, 0
    %v131 = vsel %vm114, %v71, 0
    %v134 = vsel %vm114, %v72, 0
    %v137 = vsel %vm114, %v73, 0
    %139 = vmatpush.msra.mxu0 0.0
    %140 = vmatpush.msra.mxu0 0.0
    %141 = vmatpush.msra.mxu0 0.0
    %142 = vmatpush.msra.mxu0 0.0
    %143 = vmatpush.msra.mxu0 0.0
    %144 = vmatpush.msra.mxu0 0.0
    %145 = vmatpush.msra.mxu0 0.0
    %146 = vmatpush.msra.mxu0 0.0
    %147 = vmatpush.msra.mxu0 0.0
    %148 = vmatpush.msra.mxu0 0.0
    %149 = vmatpush.msra.mxu0 0.0
    %150 = vmatpush.msra.mxu0 0.0
    %151 = vmatpush.msra.mxu0 %v36
    %152 = vmatpush.msra.mxu0 %v35
    %153 = vmatpush.msra.mxu0 %v34
    %154 = vmatpush.msra.mxu0 %v33
    %155 = vmatmul.f32.gmra.mxu0 %v116
    %v156 = vpop.f32.mrf.mxu0
    %v157 = vadd.f32 %v77, %v156
    %158 = vmatmul.f32.gmra.mxu0 %v119
    %v159 = vpop.f32.mrf.mxu0
    %v160 = vadd.f32 %v82, %v159
    %161 = vmatmul.f32.gmra.mxu0 %v122
    %v162 = vpop.f32.mrf.mxu0
    %v163 = vadd.f32 %v87, %v162
    %164 = vmatmul.f32.gmra.mxu0 %v125
    %v165 = vpop.f32.mrf.mxu0
    %v166 = vadd.f32 %v92, %v165
    %167 = vmatmul.f32.gmra.mxu0 %v128
    %v168 = vpop.f32.mrf.mxu0
    %v169 = vadd.f32 %v97, %v168
    %170 = vmatmul.f32.gmra.mxu0 %v131
    %v171 = vpop.f32.mrf.mxu0
    %v172 = vadd.f32 %v102, %v171
    %173 = vmatmul.f32.gmra.mxu0 %v134
    %v174 = vpop.f32.mrf.mxu0
    %v175 = vadd.f32 %v107, %v174
    %176 = vmatmul.f32.gmra.mxu0 %v137
    %v177 = vpop.f32.mrf.mxu0
    %v178 = vadd.f32 %v112, %v177
    %179 = vdwg.mxu0
    %v180 = vtanh.pop %v157
    %v181 = vtanh.pop %v160
    %v182 = vtanh.pop %v163
    %v183 = vtanh.pop %v166
    %v184 = vtanh.pop %v169
    %v185 = vtanh.pop %v172
    %v186 = vtanh.pop %v175
    %v187 = vtanh.pop %v178
    %v188 = vld [vmem:[%s2] sm:$0xff]
    %v189 = vld [vmem:[%s2 + $0x8] sm:$0xff]
    %v190 = vld [vmem:[%s2 + $0x10] sm:$0xff]
    %v191 = vld [vmem:[%s2 + $0x18] sm:$0xff]
    %193 = vset.pattern.permute.xlu0 0
    %194 = vperm.xlu0 %193, %v45
    %v195 = vpop.permute.xlu0 %194
    %198 = vset.pattern.permute.xlu0 0
    %199 = vperm.xlu0 %198, %v46
    %v200 = vpop.permute.xlu0 %199
    %203 = vset.pattern.permute.xlu0 0
    %204 = vperm.xlu0 %203, %v47
    %v205 = vpop.permute.xlu0 %204
    %208 = vset.pattern.permute.xlu0 0
    %209 = vperm.xlu0 %208, %v48
    %v210 = vpop.permute.xlu0 %209
    %vm212 = vcmask 523264
    %v214 = vsel %vm212, %v188, 0
    %v217 = vsel %vm212, %v189, 0
    %v220 = vsel %vm212, %v190, 0
    %v223 = vsel %vm212, %v191, 0
    %225 = vmatpush.msra.mxu0 0.0
    %226 = vmatpush.msra.mxu0 0.0
    %227 = vmatpush.msra.mxu0 0.0
    %228 = vmatpush.msra.mxu0 0.0
    %229 = vmatpush.msra.mxu0 0.0
    %230 = vmatpush.msra.mxu0 0.0
    %231 = vmatpush.msra.mxu0 0.0
    %232 = vmatpush.msra.mxu0 0.0
    %233 = vmatpush.msra.mxu0 %v187
    %234 = vmatpush.msra.mxu0 %v186
    %235 = vmatpush.msra.mxu0 %v185
    %236 = vmatpush.msra.mxu0 %v184
    %237 = vmatpush.msra.mxu0 %v183
    %238 = vmatpush.msra.mxu0 %v182
    %239 = vmatpush.msra.mxu0 %v181
    %240 = vmatpush.msra.mxu0 %v180
    %241 = vmatmul.f32.gmra.mxu0 %v214
    %v242 = vpop.f32.mrf.mxu0
    %v243 = vadd.f32 %v195, %v242
    %244 = vmatmul.f32.gmra.mxu0 %v217
    %v245 = vpop.f32.mrf.mxu0
    %v246 = vadd.f32 %v200, %v245
    %247 = vmatmul.f32.gmra.mxu0 %v220
    %v248 = vpop.f32.mrf.mxu0
    %v249 = vadd.f32 %v205, %v248
    %250 = vmatmul.f32.gmra.mxu0 %v223
    %v251 = vpop.f32.mrf.mxu0
    %v252 = vadd.f32 %v210, %v251
    %253 = vdwg.mxu0
    %v254 = vtanh.pop %v243
    %v255 = vtanh.pop %v246
    %v256 = vtanh.pop %v249
    %v257 = vtanh.pop %v252
    %v258 = vld [vmem:[%s3] sm:$0xff]
    %260 = vset.pattern.permute.xlu0 0
    %261 = vperm.xlu0 %260, %v49
    %v262 = vpop.permute.xlu0 %261
    %v265 = vsel %vm114, %v258, 0
    %267 = vmatpush.msra.mxu0 0.0
    %268 = vmatpush.msra.mxu0 0.0
    %269 = vmatpush.msra.mxu0 0.0
    %270 = vmatpush.msra.mxu0 0.0
    %271 = vmatpush.msra.mxu0 0.0
    %272 = vmatpush.msra.mxu0 0.0
    %273 = vmatpush.msra.mxu0 0.0
    %274 = vmatpush.msra.mxu0 0.0
    %275 = vmatpush.msra.mxu0 0.0
    %276 = vmatpush.msra.mxu0 0.0
    %277 = vmatpush.msra.mxu0 0.0
    %278 = vmatpush.msra.mxu0 0.0
    %279 = vmatpush.msra.mxu0 %v257
    %280 = vmatpush.msra.mxu0 %v256
    %281 = vmatpush.msra.mxu0 %v255
    %282 = vmatpush.msra.mxu0 %v254
    %283 = vmatmul.f32.gmra.mxu0 %v265
    %v284 = vpop.f32.mrf.mxu0
    %v285 = vadd.f32 %v262, %v284
    %286 = vdwg.mxu0
    %v287 = vtanh.pop %v285
    %v288 = vmul.f32 %v287, 1.5
    %v289 = vmul.f32 %v287, 3.0
    %v290 = vmul.f32 %v287, %v287
    %v291 = vmul.f32 %v290, %v287
    %v292 = vadd.f32 %v289, %v291
    %v293 = vmul.f32 %v292, 0.5
    %v294 = vmul.f32 %v289, %v287
    %v295 = vadd.f32 %v294, 1.0
    %v296 = vrcp.pop %v295
    %v297 = vmul.f32 %v295, %v296
    %v298 = vsub.f32 1.0, %v297
    %v299 = vmul.f32 %v296, %v298
    %v300 = vadd.f32 %v296, %v299
    %vm301 = vweird.f32 %v295
    %vm302 = vweird.f32 %v296
    %vm303 = vmor %vm301, %vm302
    %v304 = vsel %vm303, %v296, %v300
    %v305 = vand.u32 2147483647, %v295
    %vm306 = vcmp.eq.f32.partialorder %v305, 8.507059e+37
    %v307 = vand.u32 %v295, 2147483648
    %v308 = vor.u32 1.1754944e-38, %v307
    %v309 = vsel %vm306, %v308, %v304
    %v310 = vmul.f32 %v293, %v309
    %v311 = vsub.f32 %v288, %v310
    %v312 = vround.ne.pseudo %v311
    %313 = vst [vmem:[#allocation4] sm:$0xff] %v312
    %v314 = vld [vmem:[%s4] sm:$0xff]
    %v315 = vld [vmem:[%s4 + $0x8] sm:$0xff]
    %v316 = vld [vmem:[%s4 + $0x10] sm:$0xff]
    %v317 = vld [vmem:[%s4 + $0x18] sm:$0xff]
    %319 = vset.pattern.permute.xlu0 0
    %320 = vperm.xlu0 %319, %v50
    %v321 = vpop.permute.xlu0 %320
    %324 = vset.pattern.permute.xlu0 0
    %325 = vperm.xlu0 %324, %v51
    %v326 = vpop.permute.xlu0 %325
    %329 = vset.pattern.permute.xlu0 0
    %330 = vperm.xlu0 %329, %v52
    %v331 = vpop.permute.xlu0 %330
    %334 = vset.pattern.permute.xlu0 0
    %335 = vperm.xlu0 %334, %v53
    %v336 = vpop.permute.xlu0 %335
    %vm338 = vcmask 64512
    %v340 = vsel %vm338, %v314, 0
    %v343 = vsel %vm338, %v315, 0
    %v346 = vsel %vm338, %v316, 0
    %v349 = vsel %vm338, %v317, 0
    %351 = vmatpush.msra.mxu0 0.0
    %352 = vmatpush.msra.mxu0 0.0
    %353 = vmatpush.msra.mxu0 0.0
    %354 = vmatpush.msra.mxu0 0.0
    %355 = vmatpush.msra.mxu0 0.0
    %356 = vmatpush.msra.mxu0 0.0
    %357 = vmatpush.msra.mxu0 0.0
    %358 = vmatpush.msra.mxu0 0.0
    %359 = vmatpush.msra.mxu0 0.0
    %360 = vmatpush.msra.mxu0 0.0
    %361 = vmatpush.msra.mxu0 0.0
    %362 = vmatpush.msra.mxu0 0.0
    %363 = vmatpush.msra.mxu0 0.0
    %364 = vmatpush.msra.mxu0 0.0
    %365 = vmatpush.msra.mxu0 0.0
    %366 = vmatpush.msra.mxu0 %v312
    %367 = vmatmul.f32.gmra.mxu0 %v340
    %v368 = vpop.f32.mrf.mxu0
    %v369 = vadd.f32 %v321, %v368
    %370 = vmatmul.f32.gmra.mxu0 %v343
    %v371 = vpop.f32.mrf.mxu0
    %v372 = vadd.f32 %v326, %v371
    %373 = vmatmul.f32.gmra.mxu0 %v346
    %v374 = vpop.f32.mrf.mxu0
    %v375 = vadd.f32 %v331, %v374
    %376 = vmatmul.f32.gmra.mxu0 %v349
    %v377 = vpop.f32.mrf.mxu0
    %v378 = vadd.f32 %v336, %v377
    %379 = vdwg.mxu0
    %v380 = vtanh.pop %v369
    %v381 = vtanh.pop %v372
    %v382 = vtanh.pop %v375
    %v383 = vtanh.pop %v378
    %v384 = vld [vmem:[%s5] sm:$0xff]
    %v385 = vld [vmem:[%s5 + $0x8] sm:$0xff]
    %v386 = vld [vmem:[%s5 + $0x10] sm:$0xff]
    %v387 = vld [vmem:[%s5 + $0x18] sm:$0xff]
    %v388 = vld [vmem:[%s5 + $0x20] sm:$0xff]
    %v389 = vld [vmem:[%s5 + $0x28] sm:$0xff]
    %v390 = vld [vmem:[%s5 + $0x30] sm:$0xff]
    %v391 = vld [vmem:[%s5 + $0x38] sm:$0xff]
    %393 = vset.pattern.permute.xlu0 0
    %394 = vperm.xlu0 %393, %v54
    %v395 = vpop.permute.xlu0 %394
    %398 = vset.pattern.permute.xlu0 0
    %399 = vperm.xlu0 %398, %v55
    %v400 = vpop.permute.xlu0 %399
    %403 = vset.pattern.permute.xlu0 0
    %404 = vperm.xlu0 %403, %v56
    %v405 = vpop.permute.xlu0 %404
    %408 = vset.pattern.permute.xlu0 0
    %409 = vperm.xlu0 %408, %v57
    %v410 = vpop.permute.xlu0 %409
    %413 = vset.pattern.permute.xlu0 0
    %414 = vperm.xlu0 %413, %v58
    %v415 = vpop.permute.xlu0 %414
    %418 = vset.pattern.permute.xlu0 0
    %419 = vperm.xlu0 %418, %v59
    %v420 = vpop.permute.xlu0 %419
    %423 = vset.pattern.permute.xlu0 0
    %424 = vperm.xlu0 %423, %v60
    %v425 = vpop.permute.xlu0 %424
    %428 = vset.pattern.permute.xlu0 0
    %429 = vperm.xlu0 %428, %v61
    %v430 = vpop.permute.xlu0 %429
    %v433 = vsel %vm114, %v384, 0
    %v436 = vsel %vm114, %v385, 0
    %v439 = vsel %vm114, %v386, 0
    %v442 = vsel %vm114, %v387, 0
    %v445 = vsel %vm114, %v388, 0
    %v448 = vsel %vm114, %v389, 0
    %v451 = vsel %vm114, %v390, 0
    %v454 = vsel %vm114, %v391, 0
    %456 = vmatpush.msra.mxu0 0.0
    %457 = vmatpush.msra.mxu0 0.0
    %458 = vmatpush.msra.mxu0 0.0
    %459 = vmatpush.msra.mxu0 0.0
    %460 = vmatpush.msra.mxu0 0.0
    %461 = vmatpush.msra.mxu0 0.0
    %462 = vmatpush.msra.mxu0 0.0
    %463 = vmatpush.msra.mxu0 0.0
    %464 = vmatpush.msra.mxu0 0.0
    %465 = vmatpush.msra.mxu0 0.0
    %466 = vmatpush.msra.mxu0 0.0
    %467 = vmatpush.msra.mxu0 0.0
    %468 = vmatpush.msra.mxu0 %v383
    %469 = vmatpush.msra.mxu0 %v382
    %470 = vmatpush.msra.mxu0 %v381
    %471 = vmatpush.msra.mxu0 %v380
    %472 = vmatmul.f32.gmra.mxu0 %v433
    %v473 = vpop.f32.mrf.mxu0
    %v474 = vadd.f32 %v395, %v473
    %475 = vmatmul.f32.gmra.mxu0 %v436
    %v476 = vpop.f32.mrf.mxu0
    %v477 = vadd.f32 %v400, %v476
    %478 = vmatmul.f32.gmra.mxu0 %v439
    %v479 = vpop.f32.mrf.mxu0
    %v480 = vadd.f32 %v405, %v479
    %481 = vmatmul.f32.gmra.mxu0 %v442
    %v482 = vpop.f32.mrf.mxu0
    %v483 = vadd.f32 %v410, %v482
    %484 = vmatmul.f32.gmra.mxu0 %v445
    %v485 = vpop.f32.mrf.mxu0
    %v486 = vadd.f32 %v415, %v485
    %487 = vmatmul.f32.gmra.mxu0 %v448
    %v488 = vpop.f32.mrf.mxu0
    %v489 = vadd.f32 %v420, %v488
    %490 = vmatmul.f32.gmra.mxu0 %v451
    %v491 = vpop.f32.mrf.mxu0
    %v492 = vadd.f32 %v425, %v491
    %493 = vmatmul.f32.gmra.mxu0 %v454
    %v494 = vpop.f32.mrf.mxu0
    %v495 = vadd.f32 %v430, %v494
    %496 = vdwg.mxu0
    %v497 = vtanh.pop %v474
    %v498 = vtanh.pop %v477
    %v499 = vtanh.pop %v480
    %v500 = vtanh.pop %v483
    %v501 = vtanh.pop %v486
    %v502 = vtanh.pop %v489
    %v503 = vtanh.pop %v492
    %v504 = vtanh.pop %v495
    %v505 = vld [vmem:[%s6] sm:$0xff]
    %v506 = vld [vmem:[%s6 + $0x8] sm:$0xff]
    %v507 = vld [vmem:[%s6 + $0x10] sm:$0xff]
    %v508 = vld [vmem:[%s6 + $0x18] sm:$0xff]
    %510 = vset.pattern.permute.xlu0 0
    %511 = vperm.xlu0 %510, %v62
    %v512 = vpop.permute.xlu0 %511
    %515 = vset.pattern.permute.xlu0 0
    %516 = vperm.xlu0 %515, %v63
    %v517 = vpop.permute.xlu0 %516
    %520 = vset.pattern.permute.xlu0 0
    %521 = vperm.xlu0 %520, %v64
    %v522 = vpop.permute.xlu0 %521
    %525 = vset.pattern.permute.xlu0 0
    %526 = vperm.xlu0 %525, %v65
    %v527 = vpop.permute.xlu0 %526
    %v530 = vsel %vm212, %v505, 0
    %v533 = vsel %vm212, %v506, 0
    %v536 = vsel %vm212, %v507, 0
    %v539 = vsel %vm212, %v508, 0
    %541 = vmatpush.msra.mxu0 0.0
    %542 = vmatpush.msra.mxu0 0.0
    %543 = vmatpush.msra.mxu0 0.0
    %544 = vmatpush.msra.mxu0 0.0
    %545 = vmatpush.msra.mxu0 0.0
    %546 = vmatpush.msra.mxu0 0.0
    %547 = vmatpush.msra.mxu0 0.0
    %548 = vmatpush.msra.mxu0 0.0
    %549 = vmatpush.msra.mxu0 %v504
    %550 = vmatpush.msra.mxu0 %v503
    %551 = vmatpush.msra.mxu0 %v502
    %552 = vmatpush.msra.mxu0 %v501
    %553 = vmatpush.msra.mxu0 %v500
    %554 = vmatpush.msra.mxu0 %v499
    %555 = vmatpush.msra.mxu0 %v498
    %556 = vmatpush.msra.mxu0 %v497
    %557 = vmatmul.f32.gmra.mxu0 %v530
    %v558 = vpop.f32.mrf.mxu0
    %v559 = vadd.f32 %v512, %v558
    %560 = vmatmul.f32.gmra.mxu0 %v533
    %v561 = vpop.f32.mrf.mxu0
    %v562 = vadd.f32 %v517, %v561
    %563 = vmatmul.f32.gmra.mxu0 %v536
    %v564 = vpop.f32.mrf.mxu0
    %v565 = vadd.f32 %v522, %v564
    %566 = vmatmul.f32.gmra.mxu0 %v539
    %v567 = vpop.f32.mrf.mxu0
    %v568 = vadd.f32 %v527, %v567
    %569 = vdwg.mxu0
    %v570 = vtanh.pop %v559
    %v571 = vtanh.pop %v562
    %v572 = vtanh.pop %v565
    %v573 = vtanh.pop %v568
    %574 = vst [vmem:[#allocation2] sm:$0xff] %v570
    %575 = vst [vmem:[#allocation2 + $0x8] sm:$0xff] %v571
    %576 = vst [vmem:[#allocation2 + $0x10] sm:$0xff] %v572
    %577 = vst [vmem:[#allocation2 + $0x18] sm:$0xff] %v573
    // Predicated region
    $region34: #{tpu_custom_call.1} parent=1 // pred_check
      _
    $region35: #{tpu_custom_call.1} parent=1 // pred_check_branch
      %579 = sbr.rel (0) target = $region37
    $region36: #{tpu_custom_call.1} parent=1 // pred_region
      %581 = vsyncadd [#allocation3], 0
      %s582 = sshll.u32 [#allocation2], 4
      %s583 = int_to_ptr.vmem [resolvable:$true] %s582
      %s584 = sshll.u32 %s8, 4
      %s585 = int_to_ptr.hbm [resolvable:$true] %s584
      %590 = dma.vmem_to_hbm [thread:$0]  %s583, 512, %s585, [#allocation3], 128, 128, 8
    $region37: #{tpu_custom_call.1} parent=1 // pred_fallthru
      _
    // Predicated region
    $region38: #{tpu_custom_call.1} parent=1 // pred_check
      _
    $region39: #{tpu_custom_call.1} parent=1 // pred_check_branch
      %592 = sbr.rel (0) target = $region41
    $region40: #{tpu_custom_call.1} parent=1 // pred_region
      %594 = vsyncadd [#allocation5], 0
      %s596 = sshll.u32 [#allocation4], 4
      %s597 = int_to_ptr.vmem [resolvable:$true] %s596
      %s598 = sshll.u32 %s9, 4
      %s599 = int_to_ptr.hbm [resolvable:$true] %s598
      %601 = dma.vmem_to_hbm [thread:$0]  %s597, 128, %s599, [#allocation5]
    $region41: #{tpu_custom_call.1} parent=1 // pred_fallthru
      _
    // Predicated region
    $region42: #{tpu_custom_call.1} parent=1 // pred_check
      _
    $region43: #{tpu_custom_call.1} parent=1 // pred_check_branch
      %603 = sbr.rel (0) target = $region45
    $region44: #{tpu_custom_call.1} parent=1 // pred_region
      %605 = dma.done [#allocation3], 512
    $region45: #{tpu_custom_call.1} parent=1 // pred_fallthru
      _
    // Predicated region
    $region46: #{tpu_custom_call.1} parent=1 // pred_check
      _
    $region47: #{tpu_custom_call.1} parent=1 // pred_check_branch
      %607 = sbr.rel (0) target = $region49
    $region48: #{tpu_custom_call.1} parent=1 // pred_region
      %609 = dma.done [#allocation5], 128
    $region49: #{tpu_custom_call.1} parent=1 // pred_fallthru
      _
    %610 = vsyncpa [#allocation3], 1
    %611 = vsyncpa [#allocation5], 1

</llo_original>
